<compile_context>
chip_gen: v5e
topology: v5e:2x2
jax: 0.10.0
libtpu: 0.0.40
codegen_flags: <defaults>
</compile_context>

<pallas_src>
import functools

import jax
import jax.numpy as jnp
from jax import lax
from jax.experimental import pallas as pl
from jax.experimental.pallas import tpu as pltpu

SMOOTHING = 0.1          # module default
_NCORES = 2              # leading "parallel" grid axis: both TCs on v7x,
                         # harmless extra sequential steps on v5e/v6e
_MAX_TILE_ROWS = 2048    # (2048, 128) f32 block = 1 MiB per input per step
_MIN_ROWS = 32           # keeps every block a legal (sublane, lane) tile


def _round_up(x, m):
    return (x + m - 1) // m * m


def _cdiv(a, b):
    return (a + b - 1) // b


def _label_smoothing_kernel(x_ref, t_ref, acc_ref, *, smoothing, c_orig,
                            c_pad, n_valid, n_blocks, steps_per_core,
                            tile_rows, toxic_scale, aux_scale):
    p = pl.program_id(0)                  # "parallel" core axis
    i = pl.program_id(1)                  # "arbitrary" reduction axis
    gblock = p * steps_per_core + i       # logical row-block id (may be >= n_blocks)

    @pl.when(i == 0)
    def _init():
        acc_ref[...] = jnp.zeros_like(acc_ref)

    # Static per-lane class masks (flat row-major layout: class == lane % c_pad,
    # where c_pad is a power of two dividing 128).
    lane = lax.broadcasted_iota(jnp.int32, (8, 128), 1)
    cls = jnp.bitwise_and(lane, c_pad - 1)
    tox_f = (cls < 2).astype(jnp.float32)[0:1, :]                       # (1,128)
    aux_f = ((cls >= 2).astype(jnp.float32) *
             (cls < c_orig).astype(jnp.float32))[0:1, :]                # (1,128)
    cls0_f = (cls == 0).astype(jnp.float32)[0:1, :]                     # (1,128)

    # Direction probe: roll(+1) and roll(+127) are the two opposite one-lane
    # rotations; prev_s == 1.0 iff roll(+1) brings the *previous* lane.
    lane_r1 = pltpu.roll(lane, shift=1, axis=1)
    prev_s = jnp.max((lane_r1 == lane - 1).astype(jnp.float32))         # scalar
    # Use roll(+1) as the pair partner at class-1 lanes if it is "prev", and
    # at class-0 lanes if it is "next"  (XOR, written in float arithmetic).
    use_r1_f = cls0_f + prev_s - 2.0 * cls0_f * prev_s                  # (1,128)

    def contrib(x, t):
        """Per-lane, pre-scaled loss contribution, shape (tile_rows, 128) f32."""
        smooth = smoothing + (1.0 - 2.0 * smoothing) * t
        # aux head: numerically stable BCE-with-logits.
        bce = (jnp.maximum(x, 0.0) - x * smooth
               + jnp.log1p(jnp.exp(-jnp.abs(x))))
        # toxic head: per-lane form of the two-class cross entropy,
        #   pair loss = s0*softplus(x1 - x0) + s1*softplus(x0 - x1);
        # the partner logit comes from a one-lane XLU rotation.
        r1 = pltpu.roll(x, shift=1, axis=1)
        r127 = pltpu.roll(x, shift=127, axis=1)
        partner = use_r1_f * r1 + (1.0 - use_r1_f) * r127
        d = partner - x
        sp = jnp.maximum(d, 0.0) + jnp.log1p(jnp.exp(-jnp.abs(d)))      # softplus
        return ((toxic_scale * tox_f) * (smooth * sp)
                + (aux_scale * aux_f) * bce)

    def accumulate(c):
        acc_ref[...] += jnp.sum(c.reshape(tile_rows // 8, 8, 128), axis=0)

    # Interior blocks are guaranteed fully valid: skip all masking work.
    @pl.when(gblock < n_blocks - 1)
    def _full_block():
        accumulate(contrib(x_ref[...].astype(jnp.float32),
                           t_ref[...].astype(jnp.float32)))

    # Tail block (and clamped redundant steps): mask padded / OOB lanes.  The
    # mask is applied to the inputs *before* exp/log1p so garbage in implicit
    # partial blocks can never become NaN/Inf.
    @pl.when(gblock >= n_blocks - 1)
    def _tail_block():
        row = lax.broadcasted_iota(jnp.int32, (tile_rows, 128), 0)
        col = lax.broadcasted_iota(jnp.int32, (tile_rows, 128), 1)
        flat = (gblock * tile_rows + row) * 128 + col
        valid = flat < n_valid
        x = jnp.where(valid, x_ref[...].astype(jnp.float32), 0.0)
        t = jnp.where(valid, t_ref[...].astype(jnp.float32), 0.0)
        accumulate(jnp.where(valid, contrib(x, t), 0.0))


def label_smoothing_loss(x, target, *, smoothing=SMOOTHING):
    """Training-mode forward of LabelSmoothing.  x, target: (B, C), C > 2."""
    B, C = x.shape
    assert target.shape == (B, C)
    assert 2 < C <= 128, "need 2 toxic + >=1 aux columns (C <= 128 supported)"

    # ---- lane-dense flat view (free when C | 128 and B*C is 128-aligned) ----
    c_pad = C
    while 128 % c_pad:
        c_pad += 1                       # next power-of-two divisor of 128
    if c_pad != C:                       # zero columns; masked out in-kernel
        x = jnp.pad(x, ((0, 0), (0, c_pad - C)))
        target = jnp.pad(target, ((0, 0), (0, c_pad - C)))

    n_valid = B * c_pad
    flat_len = max(_round_up(n_valid, 128), _MIN_ROWS * 128)
    xf = x.reshape(-1)                   # metadata-only (row-major) reshape
    tf = target.reshape(-1)
    if flat_len != n_valid:              # tail pad; masked out in-kernel
        xf = jnp.pad(xf, (0, flat_len - n_valid))
        tf = jnp.pad(tf, (0, flat_len - n_valid))
    rows = flat_len // 128
    x2 = xf.reshape(rows, 128)
    t2 = tf.reshape(rows, 128)

    tile_rows = min(_MAX_TILE_ROWS, _round_up(_cdiv(rows, _NCORES), 32))
    n_blocks = _cdiv(rows, tile_rows)
    steps_per_core = _cdiv(n_blocks, _NCORES)

    kernel = functools.partial(
        _label_smoothing_kernel,
        smoothing=float(smoothing),
        c_orig=C,
        c_pad=c_pad,
        n_valid=n_valid,
        n_blocks=n_blocks,
        steps_per_core=steps_per_core,
        tile_rows=tile_rows,
        toxic_scale=1.0 / B,
        aux_scale=1.0 / (3.0 * B * (C - 2)),
    )

    def in_map(p, i):
        # Clamp so redundant trailing steps re-fetch the last block; their
        # contribution is masked to zero inside the kernel.
        return (jnp.minimum(p * steps_per_core + i, n_blocks - 1), 0)

    partial_sums = pl.pallas_call(
        kernel,
        out_shape=jax.ShapeDtypeStruct((_NCORES * 8, 128), jnp.float32),
        grid=(_NCORES, steps_per_core),
        in_specs=[
            pl.BlockSpec((tile_rows, 128), in_map),
            pl.BlockSpec((tile_rows, 128), in_map),
        ],
        out_specs=pl.BlockSpec((8, 128), lambda p, i: (p, 0)),
        compiler_params=pltpu.CompilerParams(
            dimension_semantics=("parallel", "arbitrary"),
            vmem_limit_bytes=32 * 1024 * 1024,
        ),
    )(x2, t2)
    return jnp.sum(partial_sums)


def _reference(x, target, smoothing=SMOOTHING):
    # Pure-JAX reference mirroring the PyTorch training forward.
    toxic_logits = x[:, :2]
    aux_logits = x[:, 2:]
    pred = jax.nn.log_softmax(toxic_logits, axis=-1)
    smooth_toxic = smoothing + (1 - 2 * smoothing) * target[:, :2]
    smooth_aux = smoothing + (1 - 2 * smoothing) * target[:, 2:]
    a = aux_logits
    bce = jnp.maximum(a, 0.0) - a * smooth_aux + jnp.log1p(jnp.exp(-jnp.abs(a)))
    return jnp.mean(jnp.sum(-smooth_toxic * pred, axis=-1)) + jnp.mean(bce) / 3.0


if __name__ == "__main__":
    key = jax.random.PRNGKey(0)
    k1, k2, k3, k4 = jax.random.split(key, 4)

    # Small shape consistent with the module: 2 toxic + 6 auxiliary columns.
    B, C = 8, 8
    xa = jax.random.normal(k1, (B, C), dtype=jnp.float32)
    ta = jax.random.uniform(k2, (B, C), dtype=jnp.float32)
    loss = jax.block_until_ready(label_smoothing_loss(xa, ta))
    ref = _reference(xa, ta)
    assert jnp.allclose(loss, ref, atol=1e-5, rtol=1e-4), (loss, ref)

    # Second check: odd class count (class padding) + multi-block fast path.
    B2, C2 = 2048, 7
    xb = jax.random.normal(k3, (B2, C2), dtype=jnp.float32)
    tb = jax.random.uniform(k4, (B2, C2), dtype=jnp.float32)
    loss2 = jax.block_until_ready(label_smoothing_loss(xb, tb))
    ref2 = _reference(xb, tb)
    assert jnp.allclose(loss2, ref2, atol=1e-5, rtol=1e-4), (loss2, ref2)

    print("KERNEL_OK")
</pallas_src>

<mosaic_0001>
module attributes {stable_mosaic.version = 11 : i64} {
  func.func @_label_smoothing_kernel(%arg0: i32, %arg1: i32, %arg2: memref<32x128xf32, #tpu.memory_space<vmem>>, %arg3: memref<32x128xf32, #tpu.memory_space<vmem>>, %arg4: memref<8x128xf32, #tpu.memory_space<vmem>>) attributes {dimension_semantics = [#tpu.dimension_semantics<parallel>, #tpu.dimension_semantics<arbitrary>], iteration_bounds = array<i64: 2, 1>, scalar_prefetch = 0 : i64, scratch_operands = 0 : i64, tpu.core_type = #tpu.core_type<tc>, window_params = [{transform_indices = @transform_0, window_bounds = array<i64: 32, 128>}, {transform_indices = @transform_1, window_bounds = array<i64: 32, 128>}, {transform_indices = @transform_2, window_bounds = array<i64: 8, 128>}]} {
    %c1_i32 = arith.constant 1 : i32
    %0 = arith.muli %arg0, %c1_i32 : i32
    %1 = arith.addi %0, %arg1 : i32
    %c0_i32 = arith.constant 0 : i32
    %2 = arith.cmpi eq, %arg1, %c0_i32 : i32
    %3 = arith.extui %2 : i1 to i32
    %c0_i32_0 = arith.constant 0 : i32
    %4 = arith.cmpi ne, %3, %c0_i32_0 : i32
    scf.if %4 {
      %cst_10 = arith.constant 0.000000e+00 : f32
      %51 = vector.broadcast %cst_10 : f32 to vector<8x128xf32>
      %c0 = arith.constant 0 : index
      %c0_11 = arith.constant 0 : index
      %52 = vector.load %arg4[%c0, %c0_11] : memref<8x128xf32, #tpu.memory_space<vmem>>, vector<8x128xf32>
      tpu.vector_store %arg4[%c0, %c0_11], %51 {strides = array<i32>} : memref<8x128xf32, #tpu.memory_space<vmem>>, vector<8x128xf32>,
    } else {
    }
    %5 = tpu.iota {dimensions = array<i32: 1>} : vector<8x128xi32>
    %c7_i32 = arith.constant 7 : i32
    %6 = vector.broadcast %c7_i32 : i32 to vector<8x128xi32>
    %7 = arith.andi %5, %6 : vector<8x128xi32>
    %c2_i32 = arith.constant 2 : i32
    %8 = vector.broadcast %c2_i32 : i32 to vector<8x128xi32>
    %9 = arith.cmpi slt, %7, %8 : vector<8x128xi32>
    %10 = arith.extui %9 : vector<8x128xi1> to vector<8x128xi32>
    %11 = arith.sitofp %10 : vector<8x128xi32> to vector<8x128xf32>
    %12 = vector.extract_strided_slice %11 {offsets = [0, 0], sizes = [1, 128], strides = [1, 1]} : vector<8x128xf32> to vector<1x128xf32>
    %c2_i32_1 = arith.constant 2 : i32
    %13 = vector.broadcast %c2_i32_1 : i32 to vector<8x128xi32>
    %14 = arith.cmpi sge, %7, %13 : vector<8x128xi32>
    %15 = arith.extui %14 : vector<8x128xi1> to vector<8x128xi32>
    %16 = arith.sitofp %15 : vector<8x128xi32> to vector<8x128xf32>
    %c8_i32 = arith.constant 8 : i32
    %17 = vector.broadcast %c8_i32 : i32 to vector<8x128xi32>
    %18 = arith.cmpi slt, %7, %17 : vector<8x128xi32>
    %19 = arith.extui %18 : vector<8x128xi1> to vector<8x128xi32>
    %20 = arith.sitofp %19 : vector<8x128xi32> to vector<8x128xf32>
    %21 = arith.mulf %16, %20 : vector<8x128xf32>
    %22 = vector.extract_strided_slice %21 {offsets = [0, 0], sizes = [1, 128], strides = [1, 1]} : vector<8x128xf32> to vector<1x128xf32>
    %c0_i32_2 = arith.constant 0 : i32
    %23 = vector.broadcast %c0_i32_2 : i32 to vector<8x128xi32>
    %24 = arith.cmpi eq, %7, %23 : vector<8x128xi32>
    %25 = arith.extui %24 : vector<8x128xi1> to vector<8x128xi32>
    %26 = arith.sitofp %25 : vector<8x128xi32> to vector<8x128xf32>
    %27 = vector.extract_strided_slice %26 {offsets = [0, 0], sizes = [1, 128], strides = [1, 1]} : vector<8x128xf32> to vector<1x128xf32>
    %c1_i32_3 = arith.constant 1 : i32
    %28 = tpu.dynamic_rotate %5 by %c1_i32_3 dim 1 : vector<8x128xi32>, i32 -> vector<8x128xi32>
    %c1_i32_4 = arith.constant 1 : i32
    %29 = vector.broadcast %c1_i32_4 : i32 to vector<8x128xi32>
    %30 = arith.subi %5, %29 : vector<8x128xi32>
    %31 = arith.cmpi eq, %28, %30 : vector<8x128xi32>
    %32 = arith.extui %31 : vector<8x128xi1> to vector<8x128xi32>
    %33 = arith.sitofp %32 : vector<8x128xi32> to vector<8x128xf32>
    %34 = vector.shape_cast %33 : vector<8x128xf32> to vector<1x8x128xf32>
    %cst = arith.constant dense<0xFF800000> : vector<1xf32>
    %35 = vector.multi_reduction <maximumf>, %34, %cst [1, 2] : vector<1x8x128xf32> to vector<1xf32>
    %36 = vector.shape_cast %35 : vector<1xf32> to vector<1x1x1xf32>
    %37 = vector.extract %36[0, 0, 0] : f32 from vector<1x1x1xf32>
    %38 = vector.broadcast %37 : f32 to vector<1x128xf32>
    %39 = arith.addf %27, %38 : vector<1x128xf32>
    %cst_5 = arith.constant 2.000000e+00 : f32
    %40 = vector.broadcast %cst_5 : f32 to vector<1x128xf32>
    %41 = arith.mulf %40, %27 : vector<1x128xf32>
    %42 = vector.broadcast %37 : f32 to vector<1x128xf32>
    %43 = arith.mulf %41, %42 : vector<1x128xf32>
    %44 = arith.subf %39, %43 : vector<1x128xf32>
    %c0_i32_6 = arith.constant 0 : i32
    %45 = arith.cmpi slt, %1, %c0_i32_6 : i32
    %46 = arith.extui %45 : i1 to i32
    %c0_i32_7 = arith.constant 0 : i32
    %47 = arith.cmpi ne, %46, %c0_i32_7 : i32
    scf.if %47 {
      %c0 = arith.constant 0 : index
      %c0_10 = arith.constant 0 : index
      %51 = vector.load %arg2[%c0, %c0_10] : memref<32x128xf32, #tpu.memory_space<vmem>>, vector<32x128xf32>
      %c0_11 = arith.constant 0 : index
      %c0_12 = arith.constant 0 : index
      %52 = vector.load %arg3[%c0_11, %c0_12] : memref<32x128xf32, #tpu.memory_space<vmem>>, vector<32x128xf32>
      %cst_13 = arith.constant 8.000000e-01 : f32
      %53 = vector.broadcast %cst_13 : f32 to vector<32x128xf32>
      %54 = arith.mulf %53, %52 : vector<32x128xf32>
      %cst_14 = arith.constant 1.000000e-01 : f32
      %55 = vector.broadcast %cst_14 : f32 to vector<32x128xf32>
      %56 = arith.addf %55, %54 : vector<32x128xf32>
      %cst_15 = arith.constant 0.000000e+00 : f32
      %57 = vector.broadcast %cst_15 : f32 to vector<32x128xf32>
      %58 = arith.maximumf %51, %57 : vector<32x128xf32>
      %59 = arith.mulf %51, %56 : vector<32x128xf32>
      %60 = arith.subf %58, %59 : vector<32x128xf32>
      %61 = math.absf %51 : vector<32x128xf32>
      %cst_16 = arith.constant 0.000000e+00 : f32
      %62 = vector.broadcast %cst_16 : f32 to vector<32x128xf32>
      %63 = arith.subf %62, %61 : vector<32x128xf32>
      %64 = math.exp %63 : vector<32x128xf32>
      %65 = math.log1p %64 : vector<32x128xf32>
      %66 = arith.addf %60, %65 : vector<32x128xf32>
      %c1_i32_17 = arith.constant 1 : i32
      %67 = tpu.dynamic_rotate %51 by %c1_i32_17 dim 1 : vector<32x128xf32>, i32 -> vector<32x128xf32>
      %c127_i32 = arith.constant 127 : i32
      %68 = tpu.dynamic_rotate %51 by %c127_i32 dim 1 : vector<32x128xf32>, i32 -> vector<32x128xf32>
      %69 = vector.broadcast %44 : vector<1x128xf32> to vector<32x128xf32>
      %70 = arith.mulf %69, %67 : vector<32x128xf32>
      %cst_18 = arith.constant 1.000000e+00 : f32
      %71 = vector.broadcast %cst_18 : f32 to vector<1x128xf32>
      %72 = arith.subf %71, %44 : vector<1x128xf32>
      %73 = vector.broadcast %72 : vector<1x128xf32> to vector<32x128xf32>
      %74 = arith.mulf %73, %68 : vector<32x128xf32>
      %75 = arith.addf %70, %74 : vector<32x128xf32>
      %76 = arith.subf %75, %51 : vector<32x128xf32>
      %cst_19 = arith.constant 0.000000e+00 : f32
      %77 = vector.broadcast %cst_19 : f32 to vector<32x128xf32>
      %78 = arith.maximumf %76, %77 : vector<32x128xf32>
      %79 = math.absf %76 : vector<32x128xf32>
      %cst_20 = arith.constant 0.000000e+00 : f32
      %80 = vector.broadcast %cst_20 : f32 to vector<32x128xf32>
      %81 = arith.subf %80, %79 : vector<32x128xf32>
      %82 = math.exp %81 : vector<32x128xf32>
      %83 = math.log1p %82 : vector<32x128xf32>
      %84 = arith.addf %78, %83 : vector<32x128xf32>
      %cst_21 = arith.constant 1.250000e-01 : f32
      %85 = vector.broadcast %cst_21 : f32 to vector<1x128xf32>
      %86 = arith.mulf %85, %12 : vector<1x128xf32>
      %87 = arith.mulf %56, %84 : vector<32x128xf32>
      %88 = vector.broadcast %86 : vector<1x128xf32> to vector<32x128xf32>
      %89 = arith.mulf %88, %87 : vector<32x128xf32>
      %cst_22 = arith.constant 0.0069444445 : f32
      %90 = vector.broadcast %cst_22 : f32 to vector<1x128xf32>
      %91 = arith.mulf %90, %22 : vector<1x128xf32>
      %92 = vector.broadcast %91 : vector<1x128xf32> to vector<32x128xf32>
      %93 = arith.mulf %92, %66 : vector<32x128xf32>
      %94 = arith.addf %89, %93 : vector<32x128xf32>
      %c0_23 = arith.constant 0 : index
      %c0_24 = arith.constant 0 : index
      %95 = vector.load %arg4[%c0_23, %c0_24] : memref<8x128xf32, #tpu.memory_space<vmem>>, vector<8x128xf32>
      %96 = vector.shape_cast %94 : vector<32x128xf32> to vector<4x8x128xf32>
      %cst_25 = arith.constant dense<0.000000e+00> : vector<8x128xf32>
      %97 = vector.multi_reduction <add>, %96, %cst_25 [0] : vector<4x8x128xf32> to vector<8x128xf32>
      %98 = arith.addf %95, %97 : vector<8x128xf32>
      %c0_26 = arith.constant 0 : index
      %c0_27 = arith.constant 0 : index
      %99 = vector.load %arg4[%c0_26, %c0_27] : memref<8x128xf32, #tpu.memory_space<vmem>>, vector<8x128xf32>
      tpu.vector_store %arg4[%c0_26, %c0_27], %98 {strides = array<i32>} : memref<8x128xf32, #tpu.memory_space<vmem>>, vector<8x128xf32>,
    } else {
    }
    %c0_i32_8 = arith.constant 0 : i32
    %48 = arith.cmpi sge, %1, %c0_i32_8 : i32
    %49 = arith.extui %48 : i1 to i32
    %c0_i32_9 = arith.constant 0 : i32
    %50 = arith.cmpi ne, %49, %c0_i32_9 : i32
    scf.if %50 {
      %51 = tpu.iota {dimensions = array<i32: 0>} : vector<32x128xi32>
      %52 = tpu.iota {dimensions = array<i32: 1>} : vector<32x128xi32>
      %c32_i32 = arith.constant 32 : i32
      %53 = arith.muli %1, %c32_i32 : i32
      %54 = vector.broadcast %53 : i32 to vector<32x128xi32>
      %55 = arith.addi %54, %51 : vector<32x128xi32>
      %c128_i32 = arith.constant 128 : i32
      %56 = vector.broadcast %c128_i32 : i32 to vector<32x128xi32>
      %57 = arith.muli %55, %56 : vector<32x128xi32>
      %58 = arith.addi %57, %52 : vector<32x128xi32>
      %c64_i32 = arith.constant 64 : i32
      %59 = vector.broadcast %c64_i32 : i32 to vector<32x128xi32>
      %60 = arith.cmpi slt, %58, %59 : vector<32x128xi32>
      %c0 = arith.constant 0 : index
      %c0_10 = arith.constant 0 : index
      %61 = vector.load %arg2[%c0, %c0_10] : memref<32x128xf32, #tpu.memory_space<vmem>>, vector<32x128xf32>
      %cst_11 = arith.constant 0.000000e+00 : f32
      %62 = vector.broadcast %cst_11 : f32 to vector<32x128xf32>
      %63 = arith.select %60, %61, %62 : vector<32x128xi1>, vector<32x128xf32>
      %c0_12 = arith.constant 0 : index
      %c0_13 = arith.constant 0 : index
      %64 = vector.load %arg3[%c0_12, %c0_13] : memref<32x128xf32, #tpu.memory_space<vmem>>, vector<32x128xf32>
      %cst_14 = arith.constant 0.000000e+00 : f32
      %65 = vector.broadcast %cst_14 : f32 to vector<32x128xf32>
      %66 = arith.select %60, %64, %65 : vector<32x128xi1>, vector<32x128xf32>
      %cst_15 = arith.constant 8.000000e-01 : f32
      %67 = vector.broadcast %cst_15 : f32 to vector<32x128xf32>
      %68 = arith.mulf %67, %66 : vector<32x128xf32>
      %cst_16 = arith.constant 1.000000e-01 : f32
      %69 = vector.broadcast %cst_16 : f32 to vector<32x128xf32>
      %70 = arith.addf %69, %68 : vector<32x128xf32>
      %cst_17 = arith.constant 0.000000e+00 : f32
      %71 = vector.broadcast %cst_17 : f32 to vector<32x128xf32>
      %72 = arith.maximumf %63, %71 : vector<32x128xf32>
      %73 = arith.mulf %63, %70 : vector<32x128xf32>
      %74 = arith.subf %72, %73 : vector<32x128xf32>
      %75 = math.absf %63 : vector<32x128xf32>
      %cst_18 = arith.constant 0.000000e+00 : f32
      %76 = vector.broadcast %cst_18 : f32 to vector<32x128xf32>
      %77 = arith.subf %76, %75 : vector<32x128xf32>
      %78 = math.exp %77 : vector<32x128xf32>
      %79 = math.log1p %78 : vector<32x128xf32>
      %80 = arith.addf %74, %79 : vector<32x128xf32>
      %c1_i32_19 = arith.constant 1 : i32
      %81 = tpu.dynamic_rotate %63 by %c1_i32_19 dim 1 : vector<32x128xf32>, i32 -> vector<32x128xf32>
      %c127_i32 = arith.constant 127 : i32
      %82 = tpu.dynamic_rotate %63 by %c127_i32 dim 1 : vector<32x128xf32>, i32 -> vector<32x128xf32>
      %83 = vector.broadcast %44 : vector<1x128xf32> to vector<32x128xf32>
      %84 = arith.mulf %83, %81 : vector<32x128xf32>
      %cst_20 = arith.constant 1.000000e+00 : f32
      %85 = vector.broadcast %cst_20 : f32 to vector<1x128xf32>
      %86 = arith.subf %85, %44 : vector<1x128xf32>
      %87 = vector.broadcast %86 : vector<1x128xf32> to vector<32x128xf32>
      %88 = arith.mulf %87, %82 : vector<32x128xf32>
      %89 = arith.addf %84, %88 : vector<32x128xf32>
      %90 = arith.subf %89, %63 : vector<32x128xf32>
      %cst_21 = arith.constant 0.000000e+00 : f32
      %91 = vector.broadcast %cst_21 : f32 to vector<32x128xf32>
      %92 = arith.maximumf %90, %91 : vector<32x128xf32>
      %93 = math.absf %90 : vector<32x128xf32>
      %cst_22 = arith.constant 0.000000e+00 : f32
      %94 = vector.broadcast %cst_22 : f32 to vector<32x128xf32>
      %95 = arith.subf %94, %93 : vector<32x128xf32>
      %96 = math.exp %95 : vector<32x128xf32>
      %97 = math.log1p %96 : vector<32x128xf32>
      %98 = arith.addf %92, %97 : vector<32x128xf32>
      %cst_23 = arith.constant 1.250000e-01 : f32
      %99 = vector.broadcast %cst_23 : f32 to vector<1x128xf32>
      %100 = arith.mulf %99, %12 : vector<1x128xf32>
      %101 = arith.mulf %70, %98 : vector<32x128xf32>
      %102 = vector.broadcast %100 : vector<1x128xf32> to vector<32x128xf32>
      %103 = arith.mulf %102, %101 : vector<32x128xf32>
      %cst_24 = arith.constant 0.0069444445 : f32
      %104 = vector.broadcast %cst_24 : f32 to vector<1x128xf32>
      %105 = arith.mulf %104, %22 : vector<1x128xf32>
      %106 = vector.broadcast %105 : vector<1x128xf32> to vector<32x128xf32>
      %107 = arith.mulf %106, %80 : vector<32x128xf32>
      %108 = arith.addf %103, %107 : vector<32x128xf32>
      %cst_25 = arith.constant 0.000000e+00 : f32
      %109 = vector.broadcast %cst_25 : f32 to vector<32x128xf32>
      %110 = arith.select %60, %108, %109 : vector<32x128xi1>, vector<32x128xf32>
      %c0_26 = arith.constant 0 : index
      %c0_27 = arith.constant 0 : index
      %111 = vector.load %arg4[%c0_26, %c0_27] : memref<8x128xf32, #tpu.memory_space<vmem>>, vector<8x128xf32>
      %112 = vector.shape_cast %110 : vector<32x128xf32> to vector<4x8x128xf32>
      %cst_28 = arith.constant dense<0.000000e+00> : vector<8x128xf32>
      %113 = vector.multi_reduction <add>, %112, %cst_28 [0] : vector<4x8x128xf32> to vector<8x128xf32>
      %114 = arith.addf %111, %113 : vector<8x128xf32>
      %c0_29 = arith.constant 0 : index
      %c0_30 = arith.constant 0 : index
      %115 = vector.load %arg4[%c0_29, %c0_30] : memref<8x128xf32, #tpu.memory_space<vmem>>, vector<8x128xf32>
      tpu.vector_store %arg4[%c0_29, %c0_30], %114 {strides = array<i32>} : memref<8x128xf32, #tpu.memory_space<vmem>>, vector<8x128xf32>,
    } else {
    }
    return
  }
  func.func @transform_0(%arg0: i32, %arg1: i32) -> (i32, i32) {
    %c1_i32 = arith.constant 1 : i32
    %0 = arith.muli %arg0, %c1_i32 : i32
    %1 = arith.addi %0, %arg1 : i32
    %c0_i32 = arith.constant 0 : i32
    %2 = arith.minsi %1, %c0_i32 : i32
    %c0_i32_0 = arith.constant 0 : i32
    %c0_i32_1 = arith.constant 0 : i32
    return %2, %c0_i32_0 : i32, i32
  }
  func.func @transform_1(%arg0: i32, %arg1: i32) -> (i32, i32) {
    %c1_i32 = arith.constant 1 : i32
    %0 = arith.muli %arg0, %c1_i32 : i32
    %1 = arith.addi %0, %arg1 : i32
    %c0_i32 = arith.constant 0 : i32
    %2 = arith.minsi %1, %c0_i32 : i32
    %c0_i32_0 = arith.constant 0 : i32
    %c0_i32_1 = arith.constant 0 : i32
    return %2, %c0_i32_0 : i32, i32
  }
  func.func @transform_2(%arg0: i32, %arg1: i32) -> (i32, i32) {
    %c0_i32 = arith.constant 0 : i32
    %c0_i32_0 = arith.constant 0 : i32
    return %arg0, %c0_i32 : i32, i32
  }
}

</mosaic_0001>

<llo_original>
// kernel: tpu_custom_call.1
$region0: #{tpu_custom_call.1}
  #allocation0 [shape = 'u32[]', space=smem, size = 0x4, offset = 0x4, fixed_abs, tag = 'smem constant byte address 0x4 - core index']
  #allocation1 [shape = 'u32[72,128]{1,0:T(1,128)}', space=vmem, size = 0x9000, scoped, tag = 'internal scratch']
  %s0 = inlined_call_operand.hbm [shape: f32[32,128], index: 0, kind: input, shape index: {}]
  %s1 = inlined_call_operand.hbm [shape: f32[32,128], index: 1, kind: input, shape index: {}]
  %s2 = inlined_call_operand.hbm [shape: f32[16,128], index: 2, kind: output, shape index: {}]
  %s3 = sld [smem:[#allocation0]]
  $region61: #{tpu_custom_call.1} parent=0
    _
  %s5 = ssub.s32 1, %s3
  %s6 = scalar_select 0, %s5, %s3
  $region1: #{tpu_custom_call.1} parent=0
    #allocation2 [shape = 'u8[32768]{0}', space=vmem, size = 0x8000, scoped, tag = 'input window, operand 0']
    #allocation3 [shape = 's32[2]{0}', space=sflag, size = 0x8, scoped, tag = 'scoped memory for tpu_custom_call.1']
    #allocation4 [shape = 's32[2]{0}', space=sflag, size = 0x8, scoped, tag = 'scoped memory for tpu_custom_call.1']
    #allocation5 [shape = 'u8[32768]{0}', space=vmem, size = 0x8000, scoped, tag = 'input window, operand 1']
    #allocation6 [shape = 's32[2]{0}', space=sflag, size = 0x8, scoped, tag = 'scoped memory for tpu_custom_call.1']
    #allocation7 [shape = 'u8[8192]{0}', space=vmem, size = 0x2000, scoped, tag = 'output window, operand 0']
    %7 = vsyncpa [#allocation3], 0
    %s8 = scalar_lea.sflag [#allocation3], 1
    %9 = vsyncpa %s8, 0
    %10 = vsyncpa [#allocation6], 0
    %s11 = scalar_lea.sflag [#allocation6], 1
    %12 = vsyncpa %s11, 0
    %13 = vsyncpa [#allocation4], 0
    %s14 = scalar_lea.sflag [#allocation4], 1
    %15 = vsyncpa %s14, 0
    loop: start=0, step=1, limit=4
    $region2: #{tpu_custom_call.1} parent=1 // loop_pre_header
      _
    $region3: #{tpu_custom_call.1} parent=1 // loop_header
      %s17 = sphi 0, %s21
      %p18 = scmp.ge.s32.totalorder %s17, 4
      %s24 = sphi 0, %s36
      %s25 = sphi 0, %s32
      %s26 = sphi 0, %s24
      %s27 = sphi 0, %s25
      %s28 = sphi 0, %s26
      %s29 = sphi 0, %s27
      %s45 = sphi 0, %s47
      %s48 = sphi 0, %s45
      %s49 = sphi 0, %s48
      %s65 = sphi 0, %s49
      %s77 = sphi 0, %s79
      %s80 = sphi 0, %s77
      %s81 = sphi 0, %s80
      %s97 = sphi 0, %s81
      %s103 = sphi 0, %s105
      %s106 = sphi 0, %s103
      %s107 = sphi 0, %s106
      %s123 = sphi 0, %s107
    $region4: #{tpu_custom_call.1} parent=1 // loop_header_branch
      %20 = sbr.rel (%p18) target = $region8
    $region5: #{tpu_custom_call.1} parent=1 // loop_body
      %s22 = ssub.s32 %s17, 1
      %s23 = ssub.s32 %s17, 2
      %s30 = sadd.s32 1, %s25
      %p31 = scmp.ge.s32.totalorder %s30, 1
      %s32 = scalar_select %p31, 0, %s30
      %s33 = sadd.s32 1, %s24
      %s34 = scalar_select %p31, %s33, %s24
      %p35 = scmp.ge.s32.totalorder %s34, 2
      %s36 = scalar_select %p35, 0, %s34
      %s37 = sadd.s32 %s24, %s25
      %p38 = scmp.lt.s32.totalorder %s37, 0
      %s39 = scalar_select %p38, %s37, 0
      %s40 = sadd.s32 %s36, %s32
      %p41 = scmp.lt.s32.totalorder %s40, 0
      %s42 = scalar_select %p41, %s40, 0
      %s43 = ssub.s32 %s39, %s42
      %p44 = scmp.eq.s32.totalorder %s43, 0
      %s46 = sadd.s32 %s45, 1
      %s47 = scalar_select %p44, %s45, %s46
      %p50 = pneg %p44
      %p51 = scmp.eq.s32.totalorder %s17, 1
      %p52 = por %p50, %p51
      %p53 = scmp.ne.s32.totalorder %s45, %s48
      %p54 = scmp.eq.s32.totalorder %s17, 0
      %p55 = por %p53, %p54
      %p56 = scmp.ne.s32.totalorder %s45, %s48
      %p57 = scmp.eq.s32.totalorder %s22, 1
      %p58 = por %p56, %p57
      %p59 = scmp.ne.s32.totalorder %s48, %s49
      %p60 = scmp.eq.s32.totalorder %s22, 0
      %p61 = por %p59, %p60
      %p62 = scmp.ne.s32.totalorder %s48, %s49
      %p63 = scmp.eq.s32.totalorder %s23, 1
      %p64 = por %p62, %p63
      %p66 = scmp.ne.s32.totalorder %s49, %s65
      %p67 = scmp.eq.s32.totalorder %s23, 0
      %p68 = por %p66, %p67
      %s69 = sadd.s32 %s24, %s25
      %p70 = scmp.lt.s32.totalorder %s69, 0
      %s71 = scalar_select %p70, %s69, 0
      %s72 = sadd.s32 %s36, %s32
      %p73 = scmp.lt.s32.totalorder %s72, 0
      %s74 = scalar_select %p73, %s72, 0
      %s75 = ssub.s32 %s71, %s74
      %p76 = scmp.eq.s32.totalorder %s75, 0
      %s78 = sadd.s32 %s77, 1
      %s79 = scalar_select %p76, %s77, %s78
      %p82 = pneg %p76
      %p83 = scmp.eq.s32.totalorder %s17, 1
      %p84 = por %p82, %p83
      %p85 = scmp.ne.s32.totalorder %s77, %s80
      %p86 = scmp.eq.s32.totalorder %s17, 0
      %p87 = por %p85, %p86
      %p88 = scmp.ne.s32.totalorder %s77, %s80
      %p89 = scmp.eq.s32.totalorder %s22, 1
      %p90 = por %p88, %p89
      %p91 = scmp.ne.s32.totalorder %s80, %s81
      %p92 = scmp.eq.s32.totalorder %s22, 0
      %p93 = por %p91, %p92
      %p94 = scmp.ne.s32.totalorder %s80, %s81
      %p95 = scmp.eq.s32.totalorder %s23, 1
      %p96 = por %p94, %p95
      %p98 = scmp.ne.s32.totalorder %s81, %s97
      %p99 = scmp.eq.s32.totalorder %s23, 0
      %p100 = por %p98, %p99
      %s101 = ssub.s32 %s24, %s36
      %p102 = scmp.eq.s32.totalorder %s101, 0
      %s104 = sadd.s32 %s103, 1
      %s105 = scalar_select %p102, %s103, %s104
      %p108 = pneg %p102
      %p109 = scmp.eq.s32.totalorder %s17, 1
      %p110 = por %p108, %p109
      %p111 = scmp.ne.s32.totalorder %s103, %s106
      %p112 = scmp.eq.s32.totalorder %s17, 0
      %p113 = por %p111, %p112
      %p114 = scmp.ne.s32.totalorder %s103, %s106
      %p115 = scmp.eq.s32.totalorder %s22, 1
      %p116 = por %p114, %p115
      %p117 = scmp.ne.s32.totalorder %s106, %s107
      %p118 = scmp.eq.s32.totalorder %s22, 0
      %p119 = por %p117, %p118
      %p120 = scmp.ne.s32.totalorder %s106, %s107
      %p121 = scmp.eq.s32.totalorder %s23, 1
      %p122 = por %p120, %p121
      %p124 = scmp.ne.s32.totalorder %s107, %s123
      %p125 = scmp.eq.s32.totalorder %s23, 0
      %p126 = por %p124, %p125
      %p127 = scmp.le.s32.totalorder 1, %s17
      %p128 = scmp.lt.s32.totalorder %s17, 3
      %p129 = pnand %p127, %p128
      %p130 = pneg %p129
      // Predicated region
      $region9: #{tpu_custom_call.1} parent=5 // pred_check
        _
      $region10: #{tpu_custom_call.1} parent=5 // pred_check_branch
        %132 = sbr.rel (%p129) target = $region12
      $region11: #{tpu_custom_call.1} parent=5 // pred_region
        %s133 = ssub.s32 %s17, 1
      $region12: #{tpu_custom_call.1} parent=5 // pred_fallthru
        _
      %p134 = scmp.lt.s32.totalorder %s17, 2
      // Predicated region
      $region13: #{tpu_custom_call.1} parent=5 // pred_check
        %p135 = pneg %p134
      $region14: #{tpu_custom_call.1} parent=5 // pred_check_branch
        %137 = sbr.rel (%p135) target = $region16
      $region15: #{tpu_custom_call.1} parent=5 // pred_region
        // Predicated region
        $region17: #{tpu_custom_call.1} parent=15 // pred_check
          %p138 = pneg %p55
        $region18: #{tpu_custom_call.1} parent=15 // pred_check_branch
          %140 = sbr.rel (%p138) target = $region20
        $region19: #{tpu_custom_call.1} parent=15 // pred_region
          %s141 = sand.u32 %s45, 1
          %s142 = scalar_lea.sflag [#allocation3], %s141
          %s143 = sand.u32 %s45, 1
          %s144 = smul.addr %s143, 32
          %s145 = scalar_lea.vmem [#allocation2], %s144
          %s146 = sadd.s32 %s24, %s25
          %p147 = scmp.lt.s32.totalorder %s146, 0
          %s148 = scalar_select %p147, %s146, 0
          %s149 = smul.u32 4, %s148
          %151 = vsyncadd %s142, 0
          %s152 = smul.addr %s149, 8
          %s153 = scalar_lea.hbm %s0, %s152
          %s154 = sshll.u32 %s153, 4
          %s155 = int_to_ptr.hbm [resolvable:$true] %s154
          %s156 = sshll.u32 %s145, 4
          %s157 = int_to_ptr.vmem [resolvable:$true] %s156
          %162 = dma.hbm_to_vmem [thread:$0]  %s155, 512, %s157, %s142, 128, 128, 8
        $region20: #{tpu_custom_call.1} parent=15 // pred_fallthru
          _
        // Predicated region
        $region21: #{tpu_custom_call.1} parent=15 // pred_check
          %p163 = pneg %p87
        $region22: #{tpu_custom_call.1} parent=15 // pred_check_branch
          %165 = sbr.rel (%p163) target = $region24
        $region23: #{tpu_custom_call.1} parent=15 // pred_region
          %s166 = sand.u32 %s77, 1
          %s167 = scalar_lea.sflag [#allocation6], %s166
          %s168 = sand.u32 %s77, 1
          %s169 = smul.addr %s168, 32
          %s170 = scalar_lea.vmem [#allocation5], %s169
          %s171 = sadd.s32 %s24, %s25
          %p172 = scmp.lt.s32.totalorder %s171, 0
          %s173 = scalar_select %p172, %s171, 0
          %s174 = smul.u32 4, %s173
          %176 = vsyncadd %s167, 0
          %s177 = smul.addr %s174, 8
          %s178 = scalar_lea.hbm %s1, %s177
          %s179 = sshll.u32 %s178, 4
          %s180 = int_to_ptr.hbm [resolvable:$true] %s179
          %s181 = sshll.u32 %s170, 4
          %s182 = int_to_ptr.vmem [resolvable:$true] %s181
          %187 = dma.hbm_to_vmem [thread:$0]  %s180, 512, %s182, %s167, 128, 128, 8
        $region24: #{tpu_custom_call.1} parent=15 // pred_fallthru
          _
      $region16: #{tpu_custom_call.1} parent=5 // pred_fallthru
        _
      %p188 = scmp.le.s32.totalorder 1, %s17
      %p189 = scmp.lt.s32.totalorder %s17, 3
      %p190 = pnand %p188, %p189
      %p191 = pneg %p190
      // Predicated region
      $region25: #{tpu_custom_call.1} parent=5 // pred_check
        _
      $region26: #{tpu_custom_call.1} parent=5 // pred_check_branch
        %193 = sbr.rel (%p190) target = $region28
      $region27: #{tpu_custom_call.1} parent=5 // pred_region
        %s194 = ssub.s32 %s17, 1
        %s195 = sand.u32 %s48, 1
        %s196 = scalar_lea.sflag [#allocation3], %s195
        %s197 = sand.u32 %s48, 1
        %s198 = smul.addr %s197, 32
        %s199 = scalar_lea.vmem [#allocation2], %s198
        // Predicated region
        $region29: #{tpu_custom_call.1} parent=27 // pred_check
          %p200 = pneg %p61
        $region30: #{tpu_custom_call.1} parent=27 // pred_check_branch
          %202 = sbr.rel (%p200) target = $region32
        $region31: #{tpu_custom_call.1} parent=27 // pred_region
          %204 = dma.done %s196, 512
        $region32: #{tpu_custom_call.1} parent=27 // pred_fallthru
          _
        %s205 = sand.u32 %s80, 1
        %s206 = scalar_lea.sflag [#allocation6], %s205
        %s207 = sand.u32 %s80, 1
        %s208 = smul.addr %s207, 32
        %s209 = scalar_lea.vmem [#allocation5], %s208
        // Predicated region
        $region33: #{tpu_custom_call.1} parent=27 // pred_check
          %p210 = pneg %p93
        $region34: #{tpu_custom_call.1} parent=27 // pred_check_branch
          %212 = sbr.rel (%p210) target = $region36
        $region35: #{tpu_custom_call.1} parent=27 // pred_region
          %214 = dma.done %s206, 512
        $region36: #{tpu_custom_call.1} parent=27 // pred_fallthru
          _
        %s215 = sand.u32 %s48, 1
        %s216 = scalar_lea.sflag [#allocation3], %s215
        %s217 = sand.u32 %s48, 1
        %s218 = smul.addr %s217, 32
        %s219 = scalar_lea.vmem [#allocation2], %s218
        %p220 = pneg %p61
        %p221 = pneg %p58
        %s222 = sand.u32 %s80, 1
        %s223 = scalar_lea.sflag [#allocation6], %s222
        %s224 = sand.u32 %s80, 1
        %s225 = smul.addr %s224, 32
        %s226 = scalar_lea.vmem [#allocation5], %s225
        %p227 = pneg %p93
        %p228 = pneg %p90
        %p229 = pneg %p119
        %p230 = pneg %p116
        %s231 = sand.u32 %s106, 1
        %s232 = scalar_lea.sflag [#allocation4], %s231
        %s233 = sand.u32 %s106, 1
        %s234 = smul.addr %s233, 8
        %s235 = scalar_lea.vmem [#allocation7], %s234
        %s236 = sadd.s32 %s26, %s27
        %p237 = scmp.lt.s32.totalorder %s236, 0
        %s238 = scalar_select %p237, %s236, 0
        %s239 = smul.u32 4, %s238
        %s240 = sadd.s32 %s26, %s27
        %p241 = scmp.lt.s32.totalorder %s240, 0
        %s242 = scalar_select %p241, %s240, 0
        %s243 = smul.u32 4, %s242
        %s244 = sadd.s32 %s26, %s27
        %p245 = scmp.eq.s32.totalorder %s27, 0
        // Predicated region
        $region37: #{tpu_custom_call.1} parent=27 // pred_check
          %p246 = pneg %p245
        $region38: #{tpu_custom_call.1} parent=27 // pred_check_branch
          %248 = sbr.rel (%p246) target = $region40
        $region39: #{tpu_custom_call.1} parent=27 // pred_region
          %249 = vst [vmem:[%s235] sm:$0xff] 0.0
        $region40: #{tpu_custom_call.1} parent=27 // pred_fallthru
          _
        %v250 = vlaneseq
        %v251 = vand.u32 %v250, 127
        %v252 = vand.u32 %v251, 7
        %vm253 = vcmp.lt.s32.totalorder %v252, 2
        %v254 = vsel %vm253, 1, 0
        %v255 = vcvt.s32.f32 %v254
        %vm256 = vcmp.ge.s32.totalorder %v252, 2
        %v257 = vsel %vm256, 1, 0
        %v258 = vcvt.s32.f32 %v257
        %vm259 = vcmp.lt.s32.totalorder %v252, 8
        %v260 = vsel %vm259, 1, 0
        %v261 = vcvt.s32.f32 %v260
        %v262 = vmul.f32 %v258, %v261
        %vm263 = vcmp.eq.s32.totalorder %v252, 0
        %v264 = vsel %vm263, 1, 0
        %v265 = vcvt.s32.f32 %v264
        %266 = vrot.lane.b32.xlu0 %v251, 1
        %v267 = vpop.permute.xlu0 %266
        %v268 = vsub.s32 %v251, 1
        %vm269 = vcmp.eq.s32.totalorder %v267, %v268
        %v270 = vsel %vm269, 1, 0
        %v271 = vcvt.s32.f32 %v270
        %272 = vmax.xlane.f32.xlu0 %v271
        %v273 = vpop.xlane.xlu0 %272
        %v274 = vrot.slane %v273, 4
        %v275 = vmax.f32 %v273, %v274
        %v276 = vrot.slane %v275, 2
        %v277 = vmax.f32 %v275, %v276
        %v278 = vrot.slane %v277, 1
        %v279 = vmax.f32 %v277, %v278
        %s280 = vtos %v279
        %v281 = vstv %s280
        %v282 = vadd.f32 %v265, %v281
        %v283 = vmul.f32 %v265, 2.0
        %v284 = vmul.f32 %v283, %v281
        %v285 = vsub.f32 %v282, %v284
        %p286 = scmp.lt.s32.totalorder %s244, 0
        // Predicated region
        $region41: #{tpu_custom_call.1} parent=27 // pred_check
          %p287 = pneg %p286
        $region42: #{tpu_custom_call.1} parent=27 // pred_check_branch
          %289 = sbr.rel (%p287) target = $region44
        $region43: #{tpu_custom_call.1} parent=27 // pred_region
          %v290 = vld [vmem:[%s199] sm:$0xff]
          %v291 = vld [vmem:[%s199 + $0x8] sm:$0xff]
          %v292 = vld [vmem:[%s199 + $0x10] sm:$0xff]
          %v293 = vld [vmem:[%s199 + $0x18] sm:$0xff]
          %v294 = vld [vmem:[%s209] sm:$0xff]
          %v295 = vld [vmem:[%s209 + $0x8] sm:$0xff]
          %v296 = vld [vmem:[%s209 + $0x10] sm:$0xff]
          %v297 = vld [vmem:[%s209 + $0x18] sm:$0xff]
          %v298 = vmul.f32 %v294, 0.8
          %v299 = vmul.f32 %v295, 0.8
          %v300 = vmul.f32 %v296, 0.8
          %v301 = vmul.f32 %v297, 0.8
          %v302 = vadd.f32 %v298, 0.1
          %v303 = vadd.f32 %v299, 0.1
          %v304 = vadd.f32 %v300, 0.1
          %v305 = vadd.f32 %v301, 0.1
          %v306 = vmax.f32 %v290, 0.0
          %v307 = vmax.f32 %v291, 0.0
          %v308 = vmax.f32 %v292, 0.0
          %v309 = vmax.f32 %v293, 0.0
          %v310 = vmul.f32 %v290, %v302
          %v311 = vmul.f32 %v291, %v303
          %v312 = vmul.f32 %v292, %v304
          %v313 = vmul.f32 %v293, %v305
          %v314 = vsub.f32 %v306, %v310
          %v315 = vsub.f32 %v307, %v311
          %v316 = vsub.f32 %v308, %v312
          %v317 = vsub.f32 %v309, %v313
          %v318 = vand.u32 2147483647, %v290
          %v319 = vand.u32 2147483647, %v291
          %v320 = vand.u32 2147483647, %v292
          %v321 = vand.u32 2147483647, %v293
          %v322 = vsub.f32 0.0, %v318
          %v323 = vsub.f32 0.0, %v319
          %v324 = vsub.f32 0.0, %v320
          %v325 = vsub.f32 0.0, %v321
          %v326 = vmul.f32 %v322, 1.442695
          %v327 = vpow.pop %v326
          %v328 = vmul.f32 %v323, 1.442695
          %v329 = vpow.pop %v328
          %v330 = vmul.f32 %v324, 1.442695
          %v331 = vpow.pop %v330
          %v332 = vmul.f32 %v325, 1.442695
          %v333 = vpow.pop %v332
          %v334 = vadd.f32 %v327, 1.0
          %v335 = vlog2.pop %v334
          %v336 = vmul.f32 %v335, 0.6931472
          %v337 = vmul.f32 -0.5, %v327
          %v338 = vadd.f32 %v337, 1.0
          %v339 = vmul.f32 %v338, %v327
          %v340 = vand.u32 2147483647, %v327
          %vm341 = vcmp.lt.f32.partialorder %v340, 0.0004427343
          %v342 = vsel %vm341, %v339, %v336
          %v343 = vadd.f32 %v329, 1.0
          %v344 = vlog2.pop %v343
          %v345 = vmul.f32 %v344, 0.6931472
          %v346 = vmul.f32 -0.5, %v329
          %v347 = vadd.f32 %v346, 1.0
          %v348 = vmul.f32 %v347, %v329
          %v349 = vand.u32 2147483647, %v329
          %vm350 = vcmp.lt.f32.partialorder %v349, 0.0004427343
          %v351 = vsel %vm350, %v348, %v345
          %v352 = vadd.f32 %v331, 1.0
          %v353 = vlog2.pop %v352
          %v354 = vmul.f32 %v353, 0.6931472
          %v355 = vmul.f32 -0.5, %v331
          %v356 = vadd.f32 %v355, 1.0
          %v357 = vmul.f32 %v356, %v331
          %v358 = vand.u32 2147483647, %v331
          %vm359 = vcmp.lt.f32.partialorder %v358, 0.0004427343
          %v360 = vsel %vm359, %v357, %v354
          %v361 = vadd.f32 %v333, 1.0
          %v362 = vlog2.pop %v361
          %v363 = vmul.f32 %v362, 0.6931472
          %v364 = vmul.f32 -0.5, %v333
          %v365 = vadd.f32 %v364, 1.0
          %v366 = vmul.f32 %v365, %v333
          %v367 = vand.u32 2147483647, %v333
          %vm368 = vcmp.lt.f32.partialorder %v367, 0.0004427343
          %v369 = vsel %vm368, %v366, %v363
          %v370 = vadd.f32 %v314, %v342
          %v371 = vadd.f32 %v315, %v351
          %v372 = vadd.f32 %v316, %v360
          %v373 = vadd.f32 %v317, %v369
          %374 = vrot.lane.b32.xlu0 %v290, 1
          %v375 = vpop.permute.xlu0 %374
          %376 = vrot.lane.b32.xlu0 %v291, 1
          %v377 = vpop.permute.xlu0 %376
          %378 = vrot.lane.b32.xlu0 %v292, 1
          %v379 = vpop.permute.xlu0 %378
          %380 = vrot.lane.b32.xlu0 %v293, 1
          %v381 = vpop.permute.xlu0 %380
          %382 = vrot.lane.b32.xlu0 %v290, 127
          %v383 = vpop.permute.xlu0 %382
          %384 = vrot.lane.b32.xlu0 %v291, 127
          %v385 = vpop.permute.xlu0 %384
          %386 = vrot.lane.b32.xlu0 %v292, 127
          %v387 = vpop.permute.xlu0 %386
          %388 = vrot.lane.b32.xlu0 %v293, 127
          %v389 = vpop.permute.xlu0 %388
          %v390 = vmul.f32 %v285, %v375
          %v391 = vmul.f32 %v285, %v377
          %v392 = vmul.f32 %v285, %v379
          %v393 = vmul.f32 %v285, %v381
          %v394 = vsub.f32 1.0, %v285
          %v395 = vmul.f32 %v394, %v383
          %v396 = vmul.f32 %v394, %v385
          %v397 = vmul.f32 %v394, %v387
          %v398 = vmul.f32 %v394, %v389
          %v399 = vadd.f32 %v390, %v395
          %v400 = vadd.f32 %v391, %v396
          %v401 = vadd.f32 %v392, %v397
          %v402 = vadd.f32 %v393, %v398
          %v403 = vsub.f32 %v399, %v290
          %v404 = vsub.f32 %v400, %v291
          %v405 = vsub.f32 %v401, %v292
          %v406 = vsub.f32 %v402, %v293
          %v407 = vmax.f32 %v403, 0.0
          %v408 = vmax.f32 %v404, 0.0
          %v409 = vmax.f32 %v405, 0.0
          %v410 = vmax.f32 %v406, 0.0
          %v411 = vand.u32 2147483647, %v403
          %v412 = vand.u32 2147483647, %v404
          %v413 = vand.u32 2147483647, %v405
          %v414 = vand.u32 2147483647, %v406
          %v415 = vsub.f32 0.0, %v411
          %v416 = vsub.f32 0.0, %v412
          %v417 = vsub.f32 0.0, %v413
          %v418 = vsub.f32 0.0, %v414
          %v419 = vmul.f32 %v415, 1.442695
          %v420 = vpow.pop %v419
          %v421 = vmul.f32 %v416, 1.442695
          %v422 = vpow.pop %v421
          %v423 = vmul.f32 %v417, 1.442695
          %v424 = vpow.pop %v423
          %v425 = vmul.f32 %v418, 1.442695
          %v426 = vpow.pop %v425
          %v427 = vadd.f32 %v420, 1.0
          %v428 = vlog2.pop %v427
          %v429 = vmul.f32 %v428, 0.6931472
          %v430 = vmul.f32 -0.5, %v420
          %v431 = vadd.f32 %v430, 1.0
          %v432 = vmul.f32 %v431, %v420
          %v433 = vand.u32 2147483647, %v420
          %vm434 = vcmp.lt.f32.partialorder %v433, 0.0004427343
          %v435 = vsel %vm434, %v432, %v429
          %v436 = vadd.f32 %v422, 1.0
          %v437 = vlog2.pop %v436
          %v438 = vmul.f32 %v437, 0.6931472
          %v439 = vmul.f32 -0.5, %v422
          %v440 = vadd.f32 %v439, 1.0
          %v441 = vmul.f32 %v440, %v422
          %v442 = vand.u32 2147483647, %v422
          %vm443 = vcmp.lt.f32.partialorder %v442, 0.0004427343
          %v444 = vsel %vm443, %v441, %v438
          %v445 = vadd.f32 %v424, 1.0
          %v446 = vlog2.pop %v445
          %v447 = vmul.f32 %v446, 0.6931472
          %v448 = vmul.f32 -0.5, %v424
          %v449 = vadd.f32 %v448, 1.0
          %v450 = vmul.f32 %v449, %v424
          %v451 = vand.u32 2147483647, %v424
          %vm452 = vcmp.lt.f32.partialorder %v451, 0.0004427343
          %v453 = vsel %vm452, %v450, %v447
          %v454 = vadd.f32 %v426, 1.0
          %v455 = vlog2.pop %v454
          %v456 = vmul.f32 %v455, 0.6931472
          %v457 = vmul.f32 -0.5, %v426
          %v458 = vadd.f32 %v457, 1.0
          %v459 = vmul.f32 %v458, %v426
          %v460 = vand.u32 2147483647, %v426
          %vm461 = vcmp.lt.f32.partialorder %v460, 0.0004427343
          %v462 = vsel %vm461, %v459, %v456
          %v463 = vadd.f32 %v407, %v435
          %v464 = vadd.f32 %v408, %v444
          %v465 = vadd.f32 %v409, %v453
          %v466 = vadd.f32 %v410, %v462
          %v467 = vmul.f32 %v255, 0.125
          %v468 = vmul.f32 %v302, %v463
          %v469 = vmul.f32 %v303, %v464
          %v470 = vmul.f32 %v304, %v465
          %v471 = vmul.f32 %v305, %v466
          %v472 = vmul.f32 %v467, %v468
          %v473 = vmul.f32 %v467, %v469
          %v474 = vmul.f32 %v467, %v470
          %v475 = vmul.f32 %v467, %v471
          %v476 = vmul.f32 %v262, 0.0069444445
          %v477 = vmul.f32 %v476, %v370
          %v478 = vmul.f32 %v476, %v371
          %v479 = vmul.f32 %v476, %v372
          %v480 = vmul.f32 %v476, %v373
          %v481 = vadd.f32 %v472, %v477
          %v482 = vadd.f32 %v473, %v478
          %v483 = vadd.f32 %v474, %v479
          %v484 = vadd.f32 %v475, %v480
          %v485 = vld [vmem:[%s235] sm:$0xff]
          %v486 = vadd.f32 %v481, %v482
          %v487 = vadd.f32 %v486, %v483
          %v488 = vadd.f32 %v487, %v484
          %v489 = vadd.f32 %v485, %v488
          %490 = vst [vmem:[%s235] sm:$0xff] %v489
        $region44: #{tpu_custom_call.1} parent=27 // pred_fallthru
          _
        %p491 = scmp.ge.s32.totalorder %s244, 0
        // Predicated region
        $region45: #{tpu_custom_call.1} parent=27 // pred_check
          %p492 = pneg %p491
        $region46: #{tpu_custom_call.1} parent=27 // pred_check_branch
          %494 = sbr.rel (%p492) target = $region48
        $region47: #{tpu_custom_call.1} parent=27 // pred_region
          %v495 = vlaneseq
          %v496 = vshrl.u32 %v495, 7
          %v497 = vadd.s32 %v496, 8
          %v498 = vadd.s32 %v496, 16
          %v499 = vadd.s32 %v496, 24
          %s500 = smul.u32 %s244, 32
          %v501 = vstv %s500
          %v502 = vadd.s32 %v501, %v496
          %v503 = vadd.s32 %v501, %v497
          %v504 = vadd.s32 %v501, %v498
          %v505 = vadd.s32 %v501, %v499
          %v506 = vmul.u32 %v502, 128
          %v507 = vmul.u32 %v503, 128
          %v508 = vmul.u32 %v504, 128
          %v509 = vmul.u32 %v505, 128
          %v510 = vadd.s32 %v506, %v251
          %v511 = vadd.s32 %v507, %v251
          %v512 = vadd.s32 %v508, %v251
          %v513 = vadd.s32 %v509, %v251
          %vm514 = vcmp.lt.s32.totalorder %v510, 64
          %vm515 = vcmp.lt.s32.totalorder %v511, 64
          %vm516 = vcmp.lt.s32.totalorder %v512, 64
          %vm517 = vcmp.lt.s32.totalorder %v513, 64
          %v518 = vld [vmem:[%s199] sm:$0xff]
          %v519 = vld [vmem:[%s199 + $0x8] sm:$0xff]
          %v520 = vld [vmem:[%s199 + $0x10] sm:$0xff]
          %v521 = vld [vmem:[%s199 + $0x18] sm:$0xff]
          %v522 = vsel %vm514, %v518, 0.0
          %v523 = vsel %vm515, %v519, 0.0
          %v524 = vsel %vm516, %v520, 0.0
          %v525 = vsel %vm517, %v521, 0.0
          %v526 = vld [vmem:[%s209] sm:$0xff]
          %v527 = vld [vmem:[%s209 + $0x8] sm:$0xff]
          %v528 = vld [vmem:[%s209 + $0x10] sm:$0xff]
          %v529 = vld [vmem:[%s209 + $0x18] sm:$0xff]
          %v530 = vsel %vm514, %v526, 0.0
          %v531 = vsel %vm515, %v527, 0.0
          %v532 = vsel %vm516, %v528, 0.0
          %v533 = vsel %vm517, %v529, 0.0
          %v534 = vmul.f32 %v530, 0.8
          %v535 = vmul.f32 %v531, 0.8
          %v536 = vmul.f32 %v532, 0.8
          %v537 = vmul.f32 %v533, 0.8
          %v538 = vadd.f32 %v534, 0.1
          %v539 = vadd.f32 %v535, 0.1
          %v540 = vadd.f32 %v536, 0.1
          %v541 = vadd.f32 %v537, 0.1
          %v542 = vmax.f32 %v522, 0.0
          %v543 = vmax.f32 %v523, 0.0
          %v544 = vmax.f32 %v524, 0.0
          %v545 = vmax.f32 %v525, 0.0
          %v546 = vmul.f32 %v522, %v538
          %v547 = vmul.f32 %v523, %v539
          %v548 = vmul.f32 %v524, %v540
          %v549 = vmul.f32 %v525, %v541
          %v550 = vsub.f32 %v542, %v546
          %v551 = vsub.f32 %v543, %v547
          %v552 = vsub.f32 %v544, %v548
          %v553 = vsub.f32 %v545, %v549
          %v554 = vand.u32 2147483647, %v522
          %v555 = vand.u32 2147483647, %v523
          %v556 = vand.u32 2147483647, %v524
          %v557 = vand.u32 2147483647, %v525
          %v558 = vsub.f32 0.0, %v554
          %v559 = vsub.f32 0.0, %v555
          %v560 = vsub.f32 0.0, %v556
          %v561 = vsub.f32 0.0, %v557
          %v562 = vmul.f32 %v558, 1.442695
          %v563 = vpow.pop %v562
          %v564 = vmul.f32 %v559, 1.442695
          %v565 = vpow.pop %v564
          %v566 = vmul.f32 %v560, 1.442695
          %v567 = vpow.pop %v566
          %v568 = vmul.f32 %v561, 1.442695
          %v569 = vpow.pop %v568
          %v570 = vadd.f32 %v563, 1.0
          %v571 = vlog2.pop %v570
          %v572 = vmul.f32 %v571, 0.6931472
          %v573 = vmul.f32 -0.5, %v563
          %v574 = vadd.f32 %v573, 1.0
          %v575 = vmul.f32 %v574, %v563
          %v576 = vand.u32 2147483647, %v563
          %vm577 = vcmp.lt.f32.partialorder %v576, 0.0004427343
          %v578 = vsel %vm577, %v575, %v572
          %v579 = vadd.f32 %v565, 1.0
          %v580 = vlog2.pop %v579
          %v581 = vmul.f32 %v580, 0.6931472
          %v582 = vmul.f32 -0.5, %v565
          %v583 = vadd.f32 %v582, 1.0
          %v584 = vmul.f32 %v583, %v565
          %v585 = vand.u32 2147483647, %v565
          %vm586 = vcmp.lt.f32.partialorder %v585, 0.0004427343
          %v587 = vsel %vm586, %v584, %v581
          %v588 = vadd.f32 %v567, 1.0
          %v589 = vlog2.pop %v588
          %v590 = vmul.f32 %v589, 0.6931472
          %v591 = vmul.f32 -0.5, %v567
          %v592 = vadd.f32 %v591, 1.0
          %v593 = vmul.f32 %v592, %v567
          %v594 = vand.u32 2147483647, %v567
          %vm595 = vcmp.lt.f32.partialorder %v594, 0.0004427343
          %v596 = vsel %vm595, %v593, %v590
          %v597 = vadd.f32 %v569, 1.0
          %v598 = vlog2.pop %v597
          %v599 = vmul.f32 %v598, 0.6931472
          %v600 = vmul.f32 -0.5, %v569
          %v601 = vadd.f32 %v600, 1.0
          %v602 = vmul.f32 %v601, %v569
          %v603 = vand.u32 2147483647, %v569
          %vm604 = vcmp.lt.f32.partialorder %v603, 0.0004427343
          %v605 = vsel %vm604, %v602, %v599
          %v606 = vadd.f32 %v550, %v578
          %v607 = vadd.f32 %v551, %v587
          %v608 = vadd.f32 %v552, %v596
          %v609 = vadd.f32 %v553, %v605
          %610 = vrot.lane.b32.xlu0 %v522, 1
          %v611 = vpop.permute.xlu0 %610
          %612 = vrot.lane.b32.xlu0 %v523, 1
          %v613 = vpop.permute.xlu0 %612
          %614 = vrot.lane.b32.xlu0 %v524, 1
          %v615 = vpop.permute.xlu0 %614
          %616 = vrot.lane.b32.xlu0 %v525, 1
          %v617 = vpop.permute.xlu0 %616
          %618 = vrot.lane.b32.xlu0 %v522, 127
          %v619 = vpop.permute.xlu0 %618
          %620 = vrot.lane.b32.xlu0 %v523, 127
          %v621 = vpop.permute.xlu0 %620
          %622 = vrot.lane.b32.xlu0 %v524, 127
          %v623 = vpop.permute.xlu0 %622
          %624 = vrot.lane.b32.xlu0 %v525, 127
          %v625 = vpop.permute.xlu0 %624
          %v626 = vmul.f32 %v285, %v611
          %v627 = vmul.f32 %v285, %v613
          %v628 = vmul.f32 %v285, %v615
          %v629 = vmul.f32 %v285, %v617
          %v630 = vsub.f32 1.0, %v285
          %v631 = vmul.f32 %v630, %v619
          %v632 = vmul.f32 %v630, %v621
          %v633 = vmul.f32 %v630, %v623
          %v634 = vmul.f32 %v630, %v625
          %v635 = vadd.f32 %v626, %v631
          %v636 = vadd.f32 %v627, %v632
          %v637 = vadd.f32 %v628, %v633
          %v638 = vadd.f32 %v629, %v634
          %v639 = vsub.f32 %v635, %v522
          %v640 = vsub.f32 %v636, %v523
          %v641 = vsub.f32 %v637, %v524
          %v642 = vsub.f32 %v638, %v525
          %v643 = vmax.f32 %v639, 0.0
          %v644 = vmax.f32 %v640, 0.0
          %v645 = vmax.f32 %v641, 0.0
          %v646 = vmax.f32 %v642, 0.0
          %v647 = vand.u32 2147483647, %v639
          %v648 = vand.u32 2147483647, %v640
          %v649 = vand.u32 2147483647, %v641
          %v650 = vand.u32 2147483647, %v642
          %v651 = vsub.f32 0.0, %v647
          %v652 = vsub.f32 0.0, %v648
          %v653 = vsub.f32 0.0, %v649
          %v654 = vsub.f32 0.0, %v650
          %v655 = vmul.f32 %v651, 1.442695
          %v656 = vpow.pop %v655
          %v657 = vmul.f32 %v652, 1.442695
          %v658 = vpow.pop %v657
          %v659 = vmul.f32 %v653, 1.442695
          %v660 = vpow.pop %v659
          %v661 = vmul.f32 %v654, 1.442695
          %v662 = vpow.pop %v661
          %v663 = vadd.f32 %v656, 1.0
          %v664 = vlog2.pop %v663
          %v665 = vmul.f32 %v664, 0.6931472
          %v666 = vmul.f32 -0.5, %v656
          %v667 = vadd.f32 %v666, 1.0
          %v668 = vmul.f32 %v667, %v656
          %v669 = vand.u32 2147483647, %v656
          %vm670 = vcmp.lt.f32.partialorder %v669, 0.0004427343
          %v671 = vsel %vm670, %v668, %v665
          %v672 = vadd.f32 %v658, 1.0
          %v673 = vlog2.pop %v672
          %v674 = vmul.f32 %v673, 0.6931472
          %v675 = vmul.f32 -0.5, %v658
          %v676 = vadd.f32 %v675, 1.0
          %v677 = vmul.f32 %v676, %v658
          %v678 = vand.u32 2147483647, %v658
          %vm679 = vcmp.lt.f32.partialorder %v678, 0.0004427343
          %v680 = vsel %vm679, %v677, %v674
          %v681 = vadd.f32 %v660, 1.0
          %v682 = vlog2.pop %v681
          %v683 = vmul.f32 %v682, 0.6931472
          %v684 = vmul.f32 -0.5, %v660
          %v685 = vadd.f32 %v684, 1.0
          %v686 = vmul.f32 %v685, %v660
          %v687 = vand.u32 2147483647, %v660
          %vm688 = vcmp.lt.f32.partialorder %v687, 0.0004427343
          %v689 = vsel %vm688, %v686, %v683
          %v690 = vadd.f32 %v662, 1.0
          %v691 = vlog2.pop %v690
          %v692 = vmul.f32 %v691, 0.6931472
          %v693 = vmul.f32 -0.5, %v662
          %v694 = vadd.f32 %v693, 1.0
          %v695 = vmul.f32 %v694, %v662
          %v696 = vand.u32 2147483647, %v662
          %vm697 = vcmp.lt.f32.partialorder %v696, 0.0004427343
          %v698 = vsel %vm697, %v695, %v692
          %v699 = vadd.f32 %v643, %v671
          %v700 = vadd.f32 %v644, %v680
          %v701 = vadd.f32 %v645, %v689
          %v702 = vadd.f32 %v646, %v698
          %v703 = vmul.f32 %v255, 0.125
          %v704 = vmul.f32 %v538, %v699
          %v705 = vmul.f32 %v539, %v700
          %v706 = vmul.f32 %v540, %v701
          %v707 = vmul.f32 %v541, %v702
          %v708 = vmul.f32 %v703, %v704
          %v709 = vmul.f32 %v703, %v705
          %v710 = vmul.f32 %v703, %v706
          %v711 = vmul.f32 %v703, %v707
          %v712 = vmul.f32 %v262, 0.0069444445
          %v713 = vmul.f32 %v712, %v606
          %v714 = vmul.f32 %v712, %v607
          %v715 = vmul.f32 %v712, %v608
          %v716 = vmul.f32 %v712, %v609
          %v717 = vadd.f32 %v708, %v713
          %v718 = vadd.f32 %v709, %v714
          %v719 = vadd.f32 %v710, %v715
          %v720 = vadd.f32 %v711, %v716
          %v721 = vsel %vm514, %v717, 0.0
          %v722 = vsel %vm515, %v718, 0.0
          %v723 = vsel %vm516, %v719, 0.0
          %v724 = vsel %vm517, %v720, 0.0
          %v725 = vld [vmem:[%s235] sm:$0xff]
          %v726 = vadd.f32 %v721, %v722
          %v727 = vadd.f32 %v726, %v723
          %v728 = vadd.f32 %v727, %v724
          %v729 = vadd.f32 %v725, %v728
          %730 = vst [vmem:[%s235] sm:$0xff] %v729
        $region48: #{tpu_custom_call.1} parent=27 // pred_fallthru
          _
        %s731 = sand.u32 %s106, 1
        %s732 = scalar_lea.sflag [#allocation4], %s731
        %s733 = sand.u32 %s106, 1
        %s734 = smul.addr %s733, 8
        %s735 = scalar_lea.vmem [#allocation7], %s734
        // Predicated region
        $region49: #{tpu_custom_call.1} parent=27 // pred_check
          %p736 = pneg %p116
        $region50: #{tpu_custom_call.1} parent=27 // pred_check_branch
          %738 = sbr.rel (%p736) target = $region52
        $region51: #{tpu_custom_call.1} parent=27 // pred_region
          %740 = vsyncadd %s732, 0
          %s741 = smul.addr %s26, 8
          %s742 = scalar_lea.hbm %s2, %s741
          %s744 = sshll.u32 %s735, 4
          %s745 = int_to_ptr.vmem [resolvable:$true] %s744
          %s746 = sshll.u32 %s742, 4
          %s747 = int_to_ptr.hbm [resolvable:$true] %s746
          %749 = dma.vmem_to_hbm [thread:$0]  %s745, 128, %s747, %s732
        $region52: #{tpu_custom_call.1} parent=27 // pred_fallthru
          _
      $region28: #{tpu_custom_call.1} parent=5 // pred_fallthru
        _
      %p750 = scmp.le.s32.totalorder 2, %s17
      // Predicated region
      $region53: #{tpu_custom_call.1} parent=5 // pred_check
        %p751 = pneg %p750
      $region54: #{tpu_custom_call.1} parent=5 // pred_check_branch
        %753 = sbr.rel (%p751) target = $region56
      $region55: #{tpu_custom_call.1} parent=5 // pred_region
        %s754 = ssub.s32 %s17, 2
        // Predicated region
        $region57: #{tpu_custom_call.1} parent=55 // pred_check
          %p755 = pneg %p122
        $region58: #{tpu_custom_call.1} parent=55 // pred_check_branch
          %757 = sbr.rel (%p755) target = $region60
        $region59: #{tpu_custom_call.1} parent=55 // pred_region
          %s758 = sand.u32 %s107, 1
          %s759 = scalar_lea.sflag [#allocation4], %s758
          %s760 = sand.u32 %s107, 1
          %s761 = smul.addr %s760, 8
          %s762 = scalar_lea.vmem [#allocation7], %s761
          %764 = dma.done %s759, 128
        $region60: #{tpu_custom_call.1} parent=55 // pred_fallthru
          _
      $region56: #{tpu_custom_call.1} parent=5 // pred_fallthru
        _
    $region6: #{tpu_custom_call.1} parent=1 // loop_footer
      %s21 = sadd.s32 1, %s17
    $region7: #{tpu_custom_call.1} parent=1 // loop_footer_branch
      %16 = sbr.rel target = $region3
    $region8: #{tpu_custom_call.1} parent=1 // loop_exit
      _
    %765 = vsyncpa [#allocation3], 1
    %s766 = scalar_lea.sflag [#allocation3], 1
    %767 = vsyncpa %s766, 1
    %768 = vsyncpa [#allocation6], 1
    %s769 = scalar_lea.sflag [#allocation6], 1
    %770 = vsyncpa %s769, 1
    %771 = vsyncpa [#allocation4], 1
    %s772 = scalar_lea.sflag [#allocation4], 1
    %773 = vsyncpa %s772, 1

</llo_original>
